<compile_context>
chip_gen: v5e
topology: v5e:2x2
jax: 0.10.0
libtpu: 0.0.40
codegen_flags: <defaults>
</compile_context>

<pallas_src>
import jax
import jax.numpy as jnp
from jax.experimental import pallas as pl
from jax.experimental.pallas import tpu as pltpu


# ---------------------------------------------------------------------------
# Single-pass kernel: one whole (C, HW) image block per batch element.
# ---------------------------------------------------------------------------
def _ca_single_pass_kernel(x_ref, w1_ref, w2_ref, o_ref):
    # x_ref : (1, C, HW)  input dtype
    # w1_ref: (C4, C)     Conv2d(C, C//4, 1).weight squeezed
    # w2_ref: (C, C4)     Conv2d(C//4, C, 1).weight squeezed
    x = x_ref[0]                                                   # (C, HW)
    hw = x.shape[-1]

    # Pooling over the spatial (lane) axis, accumulate in f32.
    s = jnp.sum(x, axis=-1, keepdims=True, dtype=jnp.float32)      # (C, 1)
    avg = s * (1.0 / hw)                                           # (C, 1)
    mx = jnp.max(x, axis=-1, keepdims=True).astype(jnp.float32)    # (C, 1)

    w1 = w1_ref[...].astype(jnp.float32)                           # (C4, C)
    w2 = w2_ref[...].astype(jnp.float32)                           # (C, C4)

    # W2@relu(W1@avg) + W2@relu(W1@mx) == W2 @ (relu(W1@avg) + relu(W1@mx))
    hid = (jnp.maximum(jnp.dot(w1, avg, preferred_element_type=jnp.float32), 0.0)
           + jnp.maximum(jnp.dot(w1, mx, preferred_element_type=jnp.float32), 0.0))
    exc = jnp.dot(w2, hid, preferred_element_type=jnp.float32)     # (C, 1)

    # out = x + x*sigmoid(exc)  ==  x * (1 + sigmoid(exc))  -> one mul / element
    att1 = (1.0 + jax.nn.sigmoid(exc)).astype(x.dtype)             # (C, 1)
    o_ref[0] = (x * att1).astype(o_ref.dtype)


# ---------------------------------------------------------------------------
# Tiled two-pass fallback (large feature maps / v7x 64 MiB VMEM).
# ---------------------------------------------------------------------------
def _pool_kernel(x_ref, sum_ref, max_ref):
    # grid = (B, n_tiles); spatial-tile axis is the (last) reduction axis.
    t = pl.program_id(1)

    @pl.when(t == 0)
    def _():
        sum_ref[...] = jnp.zeros(sum_ref.shape, sum_ref.dtype)
        max_ref[...] = jnp.full(max_ref.shape, -jnp.inf, max_ref.dtype)

    x = x_ref[0]                                                   # (C, T)
    sum_ref[0] = sum_ref[0] + jnp.sum(x, axis=-1, keepdims=True,
                                      dtype=jnp.float32)
    max_ref[0] = jnp.maximum(
        max_ref[0], jnp.max(x, axis=-1, keepdims=True).astype(jnp.float32))


def _apply_kernel(x_ref, att_ref, o_ref):
    # att_ref already holds (1 + sigmoid(excite)) in the input dtype.
    o_ref[0] = (x_ref[0] * att_ref[0]).astype(o_ref.dtype)


def _pick_spatial_tile(hw, c, dsize, budget_bytes):
    """Largest divisor of hw that is lane-dense (multiple of 128, or hw itself)
    whose double-buffered in+out blocks fit the VMEM budget."""
    for n in range(1, hw + 1):
        if hw % n:
            continue
        t = hw // n
        if (t % 128 != 0) and (t != hw):
            continue
        if 4 * c * t * dsize + 2 * c * dsize <= budget_bytes:
            return t
    return hw  # degenerate fallback


def _channel_attention_tiled(x_k, w1, w2, budget_bytes):
    B, C, HW = x_k.shape
    dsize = jnp.dtype(x_k.dtype).itemsize
    T = _pick_spatial_tile(HW, C, dsize, budget_bytes)
    n_t = HW // T
    vmem_limit = int(min(56 * 2**20, max(32 * 2**20, 8 * C * T * dsize)))

    # Pass 1: spatially-tiled sum/max pooling; (B, C, 1) accumulators stay
    # resident across the 'arbitrary' tile axis.
    sums, maxs = pl.pallas_call(
        _pool_kernel,
        out_shape=(jax.ShapeDtypeStruct((B, C, 1), jnp.float32),
                   jax.ShapeDtypeStruct((B, C, 1), jnp.float32)),
        grid_spec=pltpu.PrefetchScalarGridSpec(
            num_scalar_prefetch=0,
            grid=(B, n_t),
            in_specs=[pl.BlockSpec((1, C, T), lambda b, t: (b, 0, t))],
            out_specs=[pl.BlockSpec((1, C, 1), lambda b, t: (b, 0, 0)),
                       pl.BlockSpec((1, C, 1), lambda b, t: (b, 0, 0))],
        ),
        compiler_params=pltpu.CompilerParams(
            dimension_semantics=("parallel", "arbitrary"),
            vmem_limit_bytes=vmem_limit),
        cost_estimate=pl.CostEstimate(
            flops=int(2 * B * C * HW), transcendentals=0,
            bytes_accessed=int(B * C * HW * dsize)),
    )(x_k)

    # Tiny 2-layer MLP + sigmoid on the (B, C) pooled vectors: plain JAX
    # (negligible FLOPs; keeps the apply pass a pure lane-dense multiply).
    w1f = w1.astype(jnp.float32)
    w2f = w2.astype(jnp.float32)
    avg = sums[:, :, 0] * (1.0 / HW)
    mx = maxs[:, :, 0]

    def excite(p):
        return jnp.maximum(p @ w1f.T, 0.0) @ w2f.T

    att1 = (1.0 + jax.nn.sigmoid(excite(avg) + excite(mx))).astype(x_k.dtype)
    att1 = att1[:, :, None]                                        # (B, C, 1)

    # Pass 2: fused elementwise apply, fully parallel over batch and tiles.
    return pl.pallas_call(
        _apply_kernel,
        out_shape=jax.ShapeDtypeStruct((B, C, HW), x_k.dtype),
        grid_spec=pltpu.PrefetchScalarGridSpec(
            num_scalar_prefetch=0,
            grid=(B, n_t),
            in_specs=[pl.BlockSpec((1, C, T), lambda b, t: (b, 0, t)),
                      pl.BlockSpec((1, C, 1), lambda b, t: (b, 0, 0))],
            out_specs=pl.BlockSpec((1, C, T), lambda b, t: (b, 0, t)),
        ),
        compiler_params=pltpu.CompilerParams(
            dimension_semantics=("parallel", "parallel"),
            vmem_limit_bytes=vmem_limit),
        cost_estimate=pl.CostEstimate(
            flops=int(B * C * HW), transcendentals=0,
            bytes_accessed=int(2 * B * C * HW * dsize)),
    )(x_k, att1)


# ---------------------------------------------------------------------------
# Wrapper
# ---------------------------------------------------------------------------
def channel_attention(x_nchw, w1, w2, *, max_single_block_bytes=40 * 1024 * 1024):
    """x_nchw: (B, C, H, W); w1: (C//4, C); w2: (C, C//4). Returns (B, C, H, W)."""
    B, C, H, W = x_nchw.shape
    C4 = w1.shape[0]
    HW = H * W
    dsize = jnp.dtype(x_nchw.dtype).itemsize
    wbytes = (w1.size + w2.size) * jnp.dtype(w1.dtype).itemsize

    # Contiguous reshape only -- no HBM transpose/relayout.
    x_k = x_nchw.reshape(B, C, HW)

    # Double-buffered in + out blocks plus weights.
    single_bytes = 4 * C * HW * dsize + 2 * wbytes

    if single_bytes <= max_single_block_bytes:
        vmem_limit = int(min(56 * 2**20, max(32 * 2**20, 2 * single_bytes)))
        cost = pl.CostEstimate(
            flops=int(3 * B * C * HW + 8 * B * C * C4),
            transcendentals=int(B * C),
            bytes_accessed=int(2 * B * C * HW * dsize + 2 * wbytes),
        )
        out_k = pl.pallas_call(
            _ca_single_pass_kernel,
            out_shape=jax.ShapeDtypeStruct((B, C, HW), x_nchw.dtype),
            grid_spec=pltpu.PrefetchScalarGridSpec(
                num_scalar_prefetch=0,
                grid=(B,),
                in_specs=[
                    pl.BlockSpec((1, C, HW), lambda b: (b, 0, 0)),
                    pl.BlockSpec((C4, C), lambda b: (0, 0)),
                    pl.BlockSpec((C, C4), lambda b: (0, 0)),
                ],
                out_specs=pl.BlockSpec((1, C, HW), lambda b: (b, 0, 0)),
            ),
            compiler_params=pltpu.CompilerParams(
                dimension_semantics=("parallel",),
                vmem_limit_bytes=vmem_limit),
            cost_estimate=cost,
        )(x_k, w1, w2)
    else:
        out_k = _channel_attention_tiled(x_k, w1, w2, max_single_block_bytes)

    return out_k.reshape(B, C, H, W)


# ---------------------------------------------------------------------------
# Pure-JAX reference of the PyTorch forward (NCHW).
# ---------------------------------------------------------------------------
def _reference(x, w1, w2):
    avg = jnp.mean(x, axis=(2, 3))                                 # (B, C)
    mx = jnp.max(x, axis=(2, 3))                                   # (B, C)

    def excite(p):
        h = jnp.maximum(p @ w1.T, 0.0)
        return h @ w2.T

    att = jax.nn.sigmoid(excite(avg) + excite(mx))[:, :, None, None]
    return x + x * att


if __name__ == "__main__":
    B, C, H, W = 2, 16, 16, 16       # in_planes = 16 -> hidden = 4, HW = 256
    C4 = C // 4

    key = jax.random.PRNGKey(0)
    kx, k1, k2 = jax.random.split(key, 3)
    x = jax.random.normal(kx, (B, C, H, W), dtype=jnp.float32)
    # Conv2d(C, C//4, 1, bias=False).weight -> (C4, C, 1, 1); squeezed to (C4, C)
    w1 = jax.random.normal(k1, (C4, C), dtype=jnp.float32) * 0.1
    # Conv2d(C//4, C, 1, bias=False).weight -> (C, C4, 1, 1); squeezed to (C, C4)
    w2 = jax.random.normal(k2, (C, C4), dtype=jnp.float32) * 0.1

    ref = _reference(x, w1, w2)

    # Single-pass (whole-image block) path.
    out = jax.block_until_ready(channel_attention(x, w1, w2))
    assert out.shape == (B, C, H, W)
    assert jnp.allclose(out, ref, atol=1e-5, rtol=1e-5), "single-pass mismatch"

    # Force the spatially-tiled two-pass path (large-feature-map / v7x fallback).
    out_t = jax.block_until_ready(
        channel_attention(x, w1, w2, max_single_block_bytes=48 * 1024))
    assert jnp.allclose(out_t, ref, atol=1e-5, rtol=1e-5), "tiled-path mismatch"

    print("KERNEL_OK")
</pallas_src>

<mosaic_0001>
module attributes {stable_mosaic.version = 11 : i64} {
  func.func @_ca_single_pass_kernel(%arg0: i32, %arg1: memref<1x16x256xf32, #tpu.memory_space<vmem>>, %arg2: memref<4x16xf32, #tpu.memory_space<vmem>>, %arg3: memref<16x4xf32, #tpu.memory_space<vmem>>, %arg4: memref<1x16x256xf32, #tpu.memory_space<vmem>>) attributes {dimension_semantics = [#tpu.dimension_semantics<parallel>], iteration_bounds = array<i64: 2>, scalar_prefetch = 0 : i64, scratch_operands = 0 : i64, tpu.core_type = #tpu.core_type<tc>, window_params = [{transform_indices = @transform_0, window_bounds = array<i64: 1, 16, 256>}, {pipeline_mode = #tpu.pipeline_mode<synchronous>, transform_indices = @transform_1, window_bounds = array<i64: 4, 16>}, {pipeline_mode = #tpu.pipeline_mode<synchronous>, transform_indices = @transform_2, window_bounds = array<i64: 16, 4>}, {transform_indices = @transform_3, window_bounds = array<i64: 1, 16, 256>}]} {
    %c0 = arith.constant 0 : index
    %c0_0 = arith.constant 0 : index
    %c0_1 = arith.constant 0 : index
    %0 = vector.load %arg1[%c0, %c0_0, %c0_1] : memref<1x16x256xf32, #tpu.memory_space<vmem>>, vector<1x16x256xf32>
    %1 = vector.shape_cast %0 : vector<1x16x256xf32> to vector<16x256xf32>
    %cst = arith.constant dense<0.000000e+00> : vector<16xf32>
    %2 = vector.multi_reduction <add>, %1, %cst [1] : vector<16x256xf32> to vector<16xf32>
    %3 = vector.shape_cast %2 : vector<16xf32> to vector<16x1xf32>
    %cst_2 = arith.constant 3.906250e-03 : f32
    %4 = vector.broadcast %cst_2 : f32 to vector<16x1xf32>
    %5 = arith.mulf %3, %4 : vector<16x1xf32>
    %cst_3 = arith.constant dense<0xFF800000> : vector<16xf32>
    %6 = vector.multi_reduction <maximumf>, %1, %cst_3 [1] : vector<16x256xf32> to vector<16xf32>
    %7 = vector.shape_cast %6 : vector<16xf32> to vector<16x1xf32>
    %c0_4 = arith.constant 0 : index
    %c0_5 = arith.constant 0 : index
    %8 = vector.load %arg2[%c0_4, %c0_5] : memref<4x16xf32, #tpu.memory_space<vmem>>, vector<4x16xf32>
    %c0_6 = arith.constant 0 : index
    %c0_7 = arith.constant 0 : index
    %9 = vector.load %arg3[%c0_6, %c0_7] : memref<16x4xf32, #tpu.memory_space<vmem>>, vector<16x4xf32>
    %cst_8 = arith.constant dense<0.000000e+00> : vector<4x1xf32>
    %10 = tpu.matmul %8, %5, %cst_8 {dimension_numbers = #tpu.dot_dimension_numbers<[1], [0], [0], [1], [0, 0, 1, 1], [], []>} : vector<4x16xf32>, vector<16x1xf32>, vector<4x1xf32> -> vector<4x1xf32>
    %cst_9 = arith.constant 0.000000e+00 : f32
    %11 = vector.broadcast %cst_9 : f32 to vector<4x1xf32>
    %12 = arith.maximumf %10, %11 : vector<4x1xf32>
    %cst_10 = arith.constant dense<0.000000e+00> : vector<4x1xf32>
    %13 = tpu.matmul %8, %7, %cst_10 {dimension_numbers = #tpu.dot_dimension_numbers<[1], [0], [0], [1], [0, 0, 1, 1], [], []>} : vector<4x16xf32>, vector<16x1xf32>, vector<4x1xf32> -> vector<4x1xf32>
    %cst_11 = arith.constant 0.000000e+00 : f32
    %14 = vector.broadcast %cst_11 : f32 to vector<4x1xf32>
    %15 = arith.maximumf %13, %14 : vector<4x1xf32>
    %16 = arith.addf %12, %15 : vector<4x1xf32>
    %cst_12 = arith.constant dense<0.000000e+00> : vector<16x1xf32>
    %17 = tpu.matmul %9, %16, %cst_12 {dimension_numbers = #tpu.dot_dimension_numbers<[1], [0], [0], [1], [0, 0, 1, 1], [], []>} : vector<16x4xf32>, vector<4x1xf32>, vector<16x1xf32> -> vector<16x1xf32>
    %18 = arith.negf %17 : vector<16x1xf32>
    %19 = math.exp %18 : vector<16x1xf32>
    %cst_13 = arith.constant 1.000000e+00 : f32
    %20 = vector.broadcast %cst_13 : f32 to vector<16x1xf32>
    %21 = arith.addf %20, %19 : vector<16x1xf32>
    %22 = arith.divf %20, %21 : vector<16x1xf32>
    %cst_14 = arith.constant 1.000000e+00 : f32
    %23 = vector.broadcast %cst_14 : f32 to vector<16x1xf32>
    %24 = arith.addf %23, %22 : vector<16x1xf32>
    %25 = vector.broadcast %24 : vector<16x1xf32> to vector<16x256xf32>
    %26 = arith.mulf %1, %25 : vector<16x256xf32>
    %c0_15 = arith.constant 0 : index
    %c0_16 = arith.constant 0 : index
    %c0_17 = arith.constant 0 : index
    %27 = vector.load %arg4[%c0_15, %c0_16, %c0_17] : memref<1x16x256xf32, #tpu.memory_space<vmem>>, vector<1x16x256xf32>
    %28 = vector.shape_cast %27 : vector<1x16x256xf32> to vector<16x256xf32>
    %29 = vector.shape_cast %26 : vector<16x256xf32> to vector<1x16x256xf32>
    tpu.vector_store %arg4[%c0_15, %c0_16, %c0_17], %29 {strides = array<i32>} : memref<1x16x256xf32, #tpu.memory_space<vmem>>, vector<1x16x256xf32>,
    return
  }
  func.func @transform_0(%arg0: i32) -> (i32, i32, i32) {
    %c0_i32 = arith.constant 0 : i32
    %c0_i32_0 = arith.constant 0 : i32
    %c0_i32_1 = arith.constant 0 : i32
    return %arg0, %c0_i32, %c0_i32_0 : i32, i32, i32
  }
  func.func @transform_1(%arg0: i32) -> (i32, i32) {
    %c0_i32 = arith.constant 0 : i32
    %c0_i32_0 = arith.constant 0 : i32
    %c0_i32_1 = arith.constant 0 : i32
    return %c0_i32, %c0_i32_0 : i32, i32
  }
  func.func @transform_2(%arg0: i32) -> (i32, i32) {
    %c0_i32 = arith.constant 0 : i32
    %c0_i32_0 = arith.constant 0 : i32
    %c0_i32_1 = arith.constant 0 : i32
    return %c0_i32, %c0_i32_0 : i32, i32
  }
  func.func @transform_3(%arg0: i32) -> (i32, i32, i32) {
    %c0_i32 = arith.constant 0 : i32
    %c0_i32_0 = arith.constant 0 : i32
    %c0_i32_1 = arith.constant 0 : i32
    return %arg0, %c0_i32, %c0_i32_0 : i32, i32, i32
  }
}

</mosaic_0001>

<llo_original>
// kernel: tpu_custom_call.1
$region0: #{tpu_custom_call.1}
  #allocation0 [shape = 'u32[]', space=smem, size = 0x4, offset = 0x4, fixed_abs, tag = 'smem constant byte address 0x4 - core index']
  #allocation1 [shape = 'u32[72,128]{1,0:T(1,128)}', space=vmem, size = 0x9000, scoped, tag = 'internal scratch']
  %s0 = inlined_call_operand.hbm [shape: f32[2,16,256], index: 0, kind: input, shape index: {}]
  %s1 = inlined_call_operand.vmem [shape: f32[4,16], index: 1, kind: input, shape index: {}]
  %s2 = inlined_call_operand.vmem [shape: f32[16,4], index: 2, kind: input, shape index: {}]
  %s3 = inlined_call_operand.hbm [shape: f32[2,16,256], index: 3, kind: output, shape index: {}]
  %s4 = sld [smem:[#allocation0]]
  $region49: #{tpu_custom_call.1} parent=0
    _
  %s6 = ssub.s32 1, %s4
  %s7 = scalar_select 0, %s6, %s4
  $region1: #{tpu_custom_call.1} parent=0
    #allocation2 [shape = 'u8[32768]{0}', space=vmem, size = 0x8000, scoped, tag = 'input window, operand 0']
    #allocation3 [shape = 's32[2]{0}', space=sflag, size = 0x8, scoped, tag = 'scoped memory for tpu_custom_call.1']
    #allocation4 [shape = 's32[2]{0}', space=sflag, size = 0x8, scoped, tag = 'scoped memory for tpu_custom_call.1']
    #allocation5 [shape = 'u8[32768]{0}', space=vmem, size = 0x8000, scoped, tag = 'output window, operand 0']
    %8 = vsyncpa [#allocation3], 0
    %s9 = scalar_lea.sflag [#allocation3], 1
    %10 = vsyncpa %s9, 0
    %11 = vsyncpa [#allocation4], 0
    %s12 = scalar_lea.sflag [#allocation4], 1
    %13 = vsyncpa %s12, 0
    loop: start=0, step=1, limit=4
    $region2: #{tpu_custom_call.1} parent=1 // loop_pre_header
      _
    $region3: #{tpu_custom_call.1} parent=1 // loop_header
      %s15 = sphi 0, %s19
      %p16 = scmp.ge.s32.totalorder %s15, 4
      %s25 = sphi 0, %s27
      %s28 = sphi 0, %s25
      %s29 = sphi 0, %s28
      %s45 = sphi 0, %s29
      %s49 = sphi 0, %s49
      %s51 = sphi 0, %s49
      %s52 = sphi 0, %s51
      %s66 = sphi 0, %s52
      %s70 = sphi 0, %s70
      %s72 = sphi 0, %s70
      %s73 = sphi 0, %s72
      %s87 = sphi 0, %s73
      %s93 = sphi 0, %s95
      %s96 = sphi 0, %s93
      %s97 = sphi 0, %s96
      %s113 = sphi 0, %s97
    $region4: #{tpu_custom_call.1} parent=1 // loop_header_branch
      %18 = sbr.rel (%p16) target = $region8
    $region5: #{tpu_custom_call.1} parent=1 // loop_body
      %s20 = ssub.s32 %s15, 1
      %s21 = ssub.s32 %s15, 2
      %s22 = sadd.s32 %s15, 1
      %s23 = ssub.s32 %s15, %s22
      %p24 = scmp.eq.s32.totalorder %s23, 0
      %s26 = sadd.s32 %s25, 1
      %s27 = scalar_select %p24, %s25, %s26
      %p30 = pneg %p24
      %p31 = scmp.eq.s32.totalorder %s15, 1
      %p32 = por %p30, %p31
      %p33 = scmp.ne.s32.totalorder %s25, %s28
      %p34 = scmp.eq.s32.totalorder %s15, 0
      %p35 = por %p33, %p34
      %p36 = scmp.ne.s32.totalorder %s25, %s28
      %p37 = scmp.eq.s32.totalorder %s20, 1
      %p38 = por %p36, %p37
      %p39 = scmp.ne.s32.totalorder %s28, %s29
      %p40 = scmp.eq.s32.totalorder %s20, 0
      %p41 = por %p39, %p40
      %p42 = scmp.ne.s32.totalorder %s28, %s29
      %p43 = scmp.eq.s32.totalorder %s21, 1
      %p44 = por %p42, %p43
      %p46 = scmp.ne.s32.totalorder %s29, %s45
      %p47 = scmp.eq.s32.totalorder %s21, 0
      %p48 = por %p46, %p47
      %s50 = sadd.s32 %s49, 1
      %p53 = scmp.eq.s32.totalorder %s15, 1
      %p54 = scmp.ne.s32.totalorder %s49, %s51
      %p55 = scmp.eq.s32.totalorder %s15, 0
      %p56 = por %p54, %p55
      %p57 = scmp.ne.s32.totalorder %s49, %s51
      %p58 = scmp.eq.s32.totalorder %s20, 1
      %p59 = por %p57, %p58
      %p60 = scmp.ne.s32.totalorder %s51, %s52
      %p61 = scmp.eq.s32.totalorder %s20, 0
      %p62 = por %p60, %p61
      %p63 = scmp.ne.s32.totalorder %s51, %s52
      %p64 = scmp.eq.s32.totalorder %s21, 1
      %p65 = por %p63, %p64
      %p67 = scmp.ne.s32.totalorder %s52, %s66
      %p68 = scmp.eq.s32.totalorder %s21, 0
      %p69 = por %p67, %p68
      %s71 = sadd.s32 %s70, 1
      %p74 = scmp.eq.s32.totalorder %s15, 1
      %p75 = scmp.ne.s32.totalorder %s70, %s72
      %p76 = scmp.eq.s32.totalorder %s15, 0
      %p77 = por %p75, %p76
      %p78 = scmp.ne.s32.totalorder %s70, %s72
      %p79 = scmp.eq.s32.totalorder %s20, 1
      %p80 = por %p78, %p79
      %p81 = scmp.ne.s32.totalorder %s72, %s73
      %p82 = scmp.eq.s32.totalorder %s20, 0
      %p83 = por %p81, %p82
      %p84 = scmp.ne.s32.totalorder %s72, %s73
      %p85 = scmp.eq.s32.totalorder %s21, 1
      %p86 = por %p84, %p85
      %p88 = scmp.ne.s32.totalorder %s73, %s87
      %p89 = scmp.eq.s32.totalorder %s21, 0
      %p90 = por %p88, %p89
      %s91 = ssub.s32 %s15, %s22
      %p92 = scmp.eq.s32.totalorder %s91, 0
      %s94 = sadd.s32 %s93, 1
      %s95 = scalar_select %p92, %s93, %s94
      %p98 = pneg %p92
      %p99 = scmp.eq.s32.totalorder %s15, 1
      %p100 = por %p98, %p99
      %p101 = scmp.ne.s32.totalorder %s93, %s96
      %p102 = scmp.eq.s32.totalorder %s15, 0
      %p103 = por %p101, %p102
      %p104 = scmp.ne.s32.totalorder %s93, %s96
      %p105 = scmp.eq.s32.totalorder %s20, 1
      %p106 = por %p104, %p105
      %p107 = scmp.ne.s32.totalorder %s96, %s97
      %p108 = scmp.eq.s32.totalorder %s20, 0
      %p109 = por %p107, %p108
      %p110 = scmp.ne.s32.totalorder %s96, %s97
      %p111 = scmp.eq.s32.totalorder %s21, 1
      %p112 = por %p110, %p111
      %p114 = scmp.ne.s32.totalorder %s97, %s113
      %p115 = scmp.eq.s32.totalorder %s21, 0
      %p116 = por %p114, %p115
      %p117 = scmp.le.s32.totalorder 1, %s15
      %p118 = scmp.lt.s32.totalorder %s15, 3
      %p119 = pnand %p117, %p118
      %p120 = pneg %p119
      // Predicated region
      $region9: #{tpu_custom_call.1} parent=5 // pred_check
        _
      $region10: #{tpu_custom_call.1} parent=5 // pred_check_branch
        %122 = sbr.rel (%p119) target = $region12
      $region11: #{tpu_custom_call.1} parent=5 // pred_region
        %s123 = ssub.s32 %s15, 1
        // Predicated region
        $region13: #{tpu_custom_call.1} parent=11 // pred_check
          %p124 = pneg %p62
        $region14: #{tpu_custom_call.1} parent=11 // pred_check_branch
          %126 = sbr.rel (%p124) target = $region16
        $region15: #{tpu_custom_call.1} parent=11 // pred_region
          _
        $region16: #{tpu_custom_call.1} parent=11 // pred_fallthru
          _
        // Predicated region
        $region17: #{tpu_custom_call.1} parent=11 // pred_check
          %p127 = pneg %p83
        $region18: #{tpu_custom_call.1} parent=11 // pred_check_branch
          %129 = sbr.rel (%p127) target = $region20
        $region19: #{tpu_custom_call.1} parent=11 // pred_region
          _
        $region20: #{tpu_custom_call.1} parent=11 // pred_fallthru
          _
      $region12: #{tpu_custom_call.1} parent=5 // pred_fallthru
        _
      %p130 = scmp.lt.s32.totalorder %s15, 2
      // Predicated region
      $region21: #{tpu_custom_call.1} parent=5 // pred_check
        %p131 = pneg %p130
      $region22: #{tpu_custom_call.1} parent=5 // pred_check_branch
        %133 = sbr.rel (%p131) target = $region24
      $region23: #{tpu_custom_call.1} parent=5 // pred_region
        // Predicated region
        $region25: #{tpu_custom_call.1} parent=23 // pred_check
          %p134 = pneg %p35
        $region26: #{tpu_custom_call.1} parent=23 // pred_check_branch
          %136 = sbr.rel (%p134) target = $region28
        $region27: #{tpu_custom_call.1} parent=23 // pred_region
          %s137 = sand.u32 %s25, 1
          %s138 = scalar_lea.sflag [#allocation3], %s137
          %s139 = sand.u32 %s25, 1
          %s140 = smul.addr %s139, 32
          %s141 = scalar_lea.vmem [#allocation2], %s140
          %143 = vsyncadd %s138, 0
          %s144 = smul.addr %s15, 4
          %s145 = smul.addr %s144, 8
          %s146 = scalar_lea.hbm %s0, %s145
          %s147 = sshll.u32 %s146, 4
          %s148 = int_to_ptr.hbm [resolvable:$true] %s147
          %s149 = sshll.u32 %s141, 4
          %s150 = int_to_ptr.vmem [resolvable:$true] %s149
          %155 = dma.hbm_to_vmem [thread:$0]  %s148, 512, %s150, %s138, 256, 256, 16
        $region28: #{tpu_custom_call.1} parent=23 // pred_fallthru
          _
      $region24: #{tpu_custom_call.1} parent=5 // pred_fallthru
        _
      %p156 = scmp.le.s32.totalorder 1, %s15
      %p157 = scmp.lt.s32.totalorder %s15, 3
      %p158 = pnand %p156, %p157
      %p159 = pneg %p158
      // Predicated region
      $region29: #{tpu_custom_call.1} parent=5 // pred_check
        _
      $region30: #{tpu_custom_call.1} parent=5 // pred_check_branch
        %161 = sbr.rel (%p158) target = $region32
      $region31: #{tpu_custom_call.1} parent=5 // pred_region
        %s162 = ssub.s32 %s15, 1
        %s163 = sand.u32 %s28, 1
        %s164 = scalar_lea.sflag [#allocation3], %s163
        %s165 = sand.u32 %s28, 1
        %s166 = smul.addr %s165, 32
        %s167 = scalar_lea.vmem [#allocation2], %s166
        // Predicated region
        $region33: #{tpu_custom_call.1} parent=31 // pred_check
          %p168 = pneg %p41
        $region34: #{tpu_custom_call.1} parent=31 // pred_check_branch
          %170 = sbr.rel (%p168) target = $region36
        $region35: #{tpu_custom_call.1} parent=31 // pred_region
          %172 = dma.done %s164, 512
        $region36: #{tpu_custom_call.1} parent=31 // pred_fallthru
          _
        %s173 = sand.u32 %s28, 1
        %s174 = scalar_lea.sflag [#allocation3], %s173
        %s175 = sand.u32 %s28, 1
        %s176 = smul.addr %s175, 32
        %s177 = scalar_lea.vmem [#allocation2], %s176
        %p178 = pneg %p41
        %p179 = pneg %p38
        %p180 = pneg %p62
        %p181 = pneg %p59
        %p182 = pneg %p83
        %p183 = pneg %p80
        %p184 = pneg %p109
        %p185 = pneg %p106
        %s186 = sand.u32 %s96, 1
        %s187 = scalar_lea.sflag [#allocation4], %s186
        %s188 = sand.u32 %s96, 1
        %s189 = smul.addr %s188, 32
        %s190 = scalar_lea.vmem [#allocation5], %s189
        %v191 = vld [vmem:[%s167] sm:$0xff]
        %v192 = vld [vmem:[%s167 + $0x8] sm:$0xff]
        %v193 = vld [vmem:[%s167 + $0x10] sm:$0xff]
        %v194 = vld [vmem:[%s167 + $0x18] sm:$0xff]
        %v195 = vadd.f32 %v191, %v192
        %196 = vadd.xlane.f32.xlu0 %v195
        %v197 = vpop.xlane.xlu0 %196
        %v198 = vadd.f32 %v193, %v194
        %199 = vadd.xlane.f32.xlu0 %v198
        %v200 = vpop.xlane.xlu0 %199
        %v201 = vmul.f32 %v197, 0.00390625
        %v202 = vmul.f32 %v200, 0.00390625
        %v203 = vmax.f32 %v191, %v192
        %204 = vmax.xlane.f32.xlu0 %v203
        %v205 = vpop.xlane.xlu0 %204
        %v206 = vmax.f32 %v193, %v194
        %207 = vmax.xlane.f32.xlu0 %v206
        %v208 = vpop.xlane.xlu0 %207
        %v209 = vld [vmem:[%s1] sm:$0xf]
        %v210 = vld [vmem:[%s2] sm:$0xff]
        %v211 = vld [vmem:[%s2 + $0x8] sm:$0xff]
        %vm212 = vcmask 130048
        %v214 = vsel %vm212, %v209, 0
        %216 = vmatpush.msra.mxu0 0.0
        %217 = vmatpush.msra.mxu0 0.0
        %218 = vmatpush.msra.mxu0 0.0
        %219 = vmatpush.msra.mxu0 0.0
        %220 = vmatpush.msra.mxu0 0.0
        %221 = vmatpush.msra.mxu0 0.0
        %222 = vmatpush.msra.mxu0 0.0
        %223 = vmatpush.msra.mxu0 0.0
        %224 = vmatpush.msra.mxu0 0.0
        %225 = vmatpush.msra.mxu0 0.0
        %226 = vmatpush.msra.mxu0 0.0
        %227 = vmatpush.msra.mxu0 0.0
        %228 = vmatpush.msra.mxu0 0.0
        %229 = vmatpush.msra.mxu0 0.0
        %230 = vmatpush.msra.mxu0 %v202
        %231 = vmatpush.msra.mxu0 %v201
        %232 = vmatmul.f32.gmra.mxu0 %v214
        %v233 = vpop.f32.mrf.mxu0
        %v234 = vadd.f32 0.0, %v233
        %235 = vdwg.mxu0
        %v236 = vmax.f32 %v234, 0.0
        %237 = vmatpush.msra.mxu0 0.0
        %238 = vmatpush.msra.mxu0 0.0
        %239 = vmatpush.msra.mxu0 0.0
        %240 = vmatpush.msra.mxu0 0.0
        %241 = vmatpush.msra.mxu0 0.0
        %242 = vmatpush.msra.mxu0 0.0
        %243 = vmatpush.msra.mxu0 0.0
        %244 = vmatpush.msra.mxu0 0.0
        %245 = vmatpush.msra.mxu0 0.0
        %246 = vmatpush.msra.mxu0 0.0
        %247 = vmatpush.msra.mxu0 0.0
        %248 = vmatpush.msra.mxu0 0.0
        %249 = vmatpush.msra.mxu0 0.0
        %250 = vmatpush.msra.mxu0 0.0
        %251 = vmatpush.msra.mxu0 %v208
        %252 = vmatpush.msra.mxu0 %v205
        %253 = vmatmul.f32.gmra.mxu0 %v214
        %v254 = vpop.f32.mrf.mxu0
        %v255 = vadd.f32 0.0, %v254
        %256 = vdwg.mxu0
        %v257 = vmax.f32 %v255, 0.0
        %v258 = vadd.f32 %v236, %v257
        %vm259 = vcmask 31744
        %v261 = vsel %vm259, %v210, 0
        %v264 = vsel %vm259, %v211, 0
        %vm266 = vcmask 1043456
        %v268 = vsel %vm266, %v258, 0
        %270 = vmatpush.msra.mxu0 0.0
        %271 = vmatpush.msra.mxu0 0.0
        %272 = vmatpush.msra.mxu0 0.0
        %273 = vmatpush.msra.mxu0 0.0
        %274 = vmatpush.msra.mxu0 0.0
        %275 = vmatpush.msra.mxu0 0.0
        %276 = vmatpush.msra.mxu0 0.0
        %277 = vmatpush.msra.mxu0 0.0
        %278 = vmatpush.msra.mxu0 0.0
        %279 = vmatpush.msra.mxu0 0.0
        %280 = vmatpush.msra.mxu0 0.0
        %281 = vmatpush.msra.mxu0 0.0
        %282 = vmatpush.msra.mxu0 0.0
        %283 = vmatpush.msra.mxu0 0.0
        %284 = vmatpush.msra.mxu0 0.0
        %285 = vmatpush.msra.mxu0 %v268
        %286 = vmatmul.f32.gmra.mxu0 %v261
        %v287 = vpop.f32.mrf.mxu0
        %v288 = vadd.f32 0.0, %v287
        %289 = vmatmul.f32.gmra.mxu0 %v264
        %v290 = vpop.f32.mrf.mxu0
        %v291 = vadd.f32 0.0, %v290
        %292 = vdwg.mxu0
        %v293 = vxor.u32 %v288, 2147483648
        %v294 = vxor.u32 %v291, 2147483648
        %v295 = vmul.f32 %v293, 1.442695
        %v296 = vpow.pop %v295
        %v297 = vmul.f32 %v294, 1.442695
        %v298 = vpow.pop %v297
        %v299 = vadd.f32 %v296, 1.0
        %v300 = vadd.f32 %v298, 1.0
        %v301 = vrcp.pop %v299
        %v302 = vmul.f32 %v299, %v301
        %v303 = vsub.f32 1.0, %v302
        %v304 = vmul.f32 %v301, %v303
        %v305 = vadd.f32 %v301, %v304
        %vm306 = vweird.f32 %v299
        %vm307 = vweird.f32 %v301
        %vm308 = vmor %vm306, %vm307
        %v309 = vsel %vm308, %v301, %v305
        %v310 = vand.u32 2147483647, %v299
        %vm311 = vcmp.eq.f32.partialorder %v310, 8.507059e+37
        %v312 = vand.u32 %v299, 2147483648
        %v313 = vor.u32 1.1754944e-38, %v312
        %v314 = vsel %vm311, %v313, %v309
        %v315 = vmul.f32 1.0, %v314
        %v316 = vrcp.pop %v300
        %v317 = vmul.f32 %v300, %v316
        %v318 = vsub.f32 1.0, %v317
        %v319 = vmul.f32 %v316, %v318
        %v320 = vadd.f32 %v316, %v319
        %vm321 = vweird.f32 %v300
        %vm322 = vweird.f32 %v316
        %vm323 = vmor %vm321, %vm322
        %v324 = vsel %vm323, %v316, %v320
        %v325 = vand.u32 2147483647, %v300
        %vm326 = vcmp.eq.f32.partialorder %v325, 8.507059e+37
        %v327 = vand.u32 %v300, 2147483648
        %v328 = vor.u32 1.1754944e-38, %v327
        %v329 = vsel %vm326, %v328, %v324
        %v330 = vmul.f32 1.0, %v329
        %v331 = vadd.f32 %v315, 1.0
        %v332 = vadd.f32 %v330, 1.0
        %334 = vset.pattern.permute.xlu0 0
        %335 = vperm.xlu0 %334, %v331
        %v336 = vpop.permute.xlu0 %335
        %339 = vset.pattern.permute.xlu0 0
        %340 = vperm.xlu0 %339, %v332
        %v341 = vpop.permute.xlu0 %340
        %v343 = vmul.f32 %v191, %v336
        %v344 = vmul.f32 %v192, %v336
        %v345 = vmul.f32 %v193, %v341
        %v346 = vmul.f32 %v194, %v341
        %347 = vst [vmem:[%s190] sm:$0xff] %v343
        %348 = vst [vmem:[%s190 + $0x8] sm:$0xff] %v344
        %349 = vst [vmem:[%s190 + $0x10] sm:$0xff] %v345
        %350 = vst [vmem:[%s190 + $0x18] sm:$0xff] %v346
        %s351 = sand.u32 %s96, 1
        %s352 = scalar_lea.sflag [#allocation4], %s351
        %s353 = sand.u32 %s96, 1
        %s354 = smul.addr %s353, 32
        %s355 = scalar_lea.vmem [#allocation5], %s354
        // Predicated region
        $region37: #{tpu_custom_call.1} parent=31 // pred_check
          %p356 = pneg %p106
        $region38: #{tpu_custom_call.1} parent=31 // pred_check_branch
          %358 = sbr.rel (%p356) target = $region40
        $region39: #{tpu_custom_call.1} parent=31 // pred_region
          %360 = vsyncadd %s352, 0
          %s361 = smul.addr %s20, 4
          %s362 = smul.addr %s361, 8
          %s363 = scalar_lea.hbm %s3, %s362
          %s364 = sshll.u32 %s355, 4
          %s365 = int_to_ptr.vmem [resolvable:$true] %s364
          %s366 = sshll.u32 %s363, 4
          %s367 = int_to_ptr.hbm [resolvable:$true] %s366
          %372 = dma.vmem_to_hbm [thread:$0]  %s365, 512, %s367, %s352, 256, 256, 16
        $region40: #{tpu_custom_call.1} parent=31 // pred_fallthru
          _
      $region32: #{tpu_custom_call.1} parent=5 // pred_fallthru
        _
      %p373 = scmp.le.s32.totalorder 2, %s15
      // Predicated region
      $region41: #{tpu_custom_call.1} parent=5 // pred_check
        %p374 = pneg %p373
      $region42: #{tpu_custom_call.1} parent=5 // pred_check_branch
        %376 = sbr.rel (%p374) target = $region44
      $region43: #{tpu_custom_call.1} parent=5 // pred_region
        %s377 = ssub.s32 %s15, 2
        // Predicated region
        $region45: #{tpu_custom_call.1} parent=43 // pred_check
          %p378 = pneg %p112
        $region46: #{tpu_custom_call.1} parent=43 // pred_check_branch
          %380 = sbr.rel (%p378) target = $region48
        $region47: #{tpu_custom_call.1} parent=43 // pred_region
          %s381 = sand.u32 %s97, 1
          %s382 = scalar_lea.sflag [#allocation4], %s381
          %s383 = sand.u32 %s97, 1
          %s384 = smul.addr %s383, 32
          %s385 = scalar_lea.vmem [#allocation5], %s384
          %387 = dma.done %s382, 512
        $region48: #{tpu_custom_call.1} parent=43 // pred_fallthru
          _
      $region44: #{tpu_custom_call.1} parent=5 // pred_fallthru
        _
    $region6: #{tpu_custom_call.1} parent=1 // loop_footer
      %s19 = sadd.s32 1, %s15
    $region7: #{tpu_custom_call.1} parent=1 // loop_footer_branch
      %14 = sbr.rel target = $region3
    $region8: #{tpu_custom_call.1} parent=1 // loop_exit
      _
    %388 = vsyncpa [#allocation3], 1
    %s389 = scalar_lea.sflag [#allocation3], 1
    %390 = vsyncpa %s389, 1
    %391 = vsyncpa [#allocation4], 1
    %s392 = scalar_lea.sflag [#allocation4], 1
    %393 = vsyncpa %s392, 1

</llo_original>
